<compile_context>
chip_gen: v7x
topology: tpu7x:2x2x1
jax: 0.10.0
libtpu: 0.0.40
codegen_flags: <defaults>
</compile_context>

<pallas_src>
import functools

import jax
import jax.numpy as jnp
from jax import lax
from jax.experimental import pallas as pl
from jax.experimental.pallas import tpu as pltpu

_LANE = 128
_SUBLANE = 8


def _masked_max_kernel(x_ref, m_ref, o_ref, acc_ref):
    """Masked global max over the lane (T) axis.

    x_ref:   (NB, C, TT) input tile.
    m_ref:   (NB, 1, TT) f32 mask (1 = keep, 0 = pad); zero-padded past the
             real T, so the ragged tail of x is neutralised here too.
    o_ref:   (NB, C, 1) output tile (resident across the T grid axis).
    acc_ref: (NB, C, 1) f32 running max scratch.
    """
    t = pl.program_id(1)

    @pl.when(t == 0)
    def _init():
        acc_ref[...] = jnp.full(acc_ref.shape, -jnp.inf, dtype=acc_ref.dtype)

    x = x_ref[...].astype(jnp.float32)                      # (NB, C, TT)
    masked = jnp.where(m_ref[...] > 0.5, x, -jnp.inf)       # VPU select, bcast over C
    tile_max = jnp.max(masked, axis=-1, keepdims=True)      # XLU lane reduce
    acc_ref[...] = jnp.maximum(acc_ref[...], tile_max)

    @pl.when(t == pl.num_programs(1) - 1)
    def _finalize():
        o_ref[...] = acc_ref[...].astype(o_ref.dtype)


def _plain_max_kernel(x_ref, o_ref, acc_ref, *, t_total, lane_tile, guard_tail):
    """Unmasked global max (padding_mask=None). Ragged-tail positions past
    t_total are excluded with an iota guard (only emitted when needed)."""
    t = pl.program_id(1)

    @pl.when(t == 0)
    def _init():
        acc_ref[...] = jnp.full(acc_ref.shape, -jnp.inf, dtype=acc_ref.dtype)

    x = x_ref[...].astype(jnp.float32)
    if guard_tail:
        lane = lax.broadcasted_iota(jnp.int32, x.shape, 2)
        x = jnp.where(t * lane_tile + lane < t_total, x, -jnp.inf)
    acc_ref[...] = jnp.maximum(acc_ref[...], jnp.max(x, axis=-1, keepdims=True))

    @pl.when(t == pl.num_programs(1) - 1)
    def _finalize():
        o_ref[...] = acc_ref[...].astype(o_ref.dtype)


def _choose_tiles(B, C, T, itemsize, *, x_budget_bytes=12 * 1024 * 1024,
                  min_block_bytes=512 * 1024):
    """Pick (nb, tt): batch rows per block and lane (T) tile width."""
    c_pad = -(-C // _SUBLANE) * _SUBLANE

    def x_fits(tt, nb=1):
        return 2 * nb * c_pad * tt * itemsize <= x_budget_bytes  # double-buffered

    # Lane tile: full T when small enough (single reduction step, no tail);
    # otherwise the largest power-of-two multiple of 128 (<= 2048) that fits.
    if T <= 2048 and x_fits(T):
        tt = T
    else:
        tt = 2048
        while tt > _LANE and (tt >= T or not x_fits(tt)):
            tt //= 2
        if tt >= T:
            tt = T

    # Batch block: amortise per-grid-step overhead when C * tt is small; each
    # step should move a few hundred KiB to sit near the HBM roofline.
    per_b_bytes = (c_pad * itemsize + _SUBLANE * 4) * tt  # x row block + mask row
    nb = 1
    if B > 1 and per_b_bytes < min_block_bytes:
        want = min(B, max(1, min_block_bytes // per_b_bytes))
        for cand in range(want, 0, -1):
            if B % cand == 0 and 2 * cand * per_b_bytes <= x_budget_bytes:
                nb = cand
                break
    return nb, tt


def global_masked_max_pooling1d(hidden_state, padding_mask=None, *,
                                lane_tile=None, batch_block=None):
    """hidden_state: (N, C, T); padding_mask: (N, T) bool/int, True = non-pad.

    Returns (N, C) when a mask is given (== torch.max(masked_fill(-inf), -1)[0])
    and (N, C, 1) when padding_mask is None (== F.adaptive_max_pool1d(x, 1)).
    lane_tile / batch_block override auto tiling (lane_tile must be a multiple
    of 128 or >= T; batch_block must divide N).
    """
    B, C, T = hidden_state.shape
    itemsize = jnp.dtype(hidden_state.dtype).itemsize

    nb, tt = _choose_tiles(B, C, T, itemsize)
    if lane_tile is not None:
        tt = T if lane_tile >= T else lane_tile
    if batch_block is not None:
        assert B % batch_block == 0
        nb = batch_block

    t_pad = pl.cdiv(T, tt) * tt
    num_t = t_pad // tt
    grid = (B // nb, num_t)

    out_shape = jax.ShapeDtypeStruct((B, C, 1), hidden_state.dtype)
    x_spec = pl.BlockSpec((nb, C, tt), lambda b, t: (b, 0, t))
    out_spec = pl.BlockSpec((nb, C, 1), lambda b, t: (b, 0, 0))
    scratch = [pltpu.VMEM((nb, C, 1), jnp.float32)]
    cparams = pltpu.CompilerParams(
        # Batch axis is independent (megacore-shardable); the T axis carries
        # the resident accumulator, so it must be "arbitrary" (and last).
        dimension_semantics=("parallel", "arbitrary"),
        # 32 MiB: raises v5e's 16 MiB default, safe on v6e (128 MiB) and v7x (64 MiB).
        vmem_limit_bytes=32 * 1024 * 1024,
    )
    cost = pl.CostEstimate(
        flops=2 * B * C * t_pad,          # compare + select per element
        transcendentals=0,
        bytes_accessed=int(B * C * T * itemsize + B * C * itemsize
                           + (0 if padding_mask is None else B * t_pad * 4)),
    )

    if padding_mask is None:
        kernel = functools.partial(
            _plain_max_kernel, t_total=T, lane_tile=tt, guard_tail=(t_pad != T))
        return pl.pallas_call(
            kernel,
            out_shape=out_shape,
            grid_spec=pltpu.PrefetchScalarGridSpec(
                num_scalar_prefetch=0,
                grid=grid,
                in_specs=[x_spec],
                out_specs=out_spec,
                scratch_shapes=scratch,
            ),
            compiler_params=cparams,
            cost_estimate=cost,
        )(hidden_state)                    # (N, C, 1) == adaptive_max_pool1d(x, 1)

    # Masked path: pad only the tiny (N, T) mask for the ragged tail; the
    # ragged tail of x is read as a partial block and masked to -inf in-kernel,
    # so no extra HBM pass over x is needed.
    mask = padding_mask.astype(jnp.float32)
    if t_pad != T:
        mask = jnp.pad(mask, ((0, 0), (0, t_pad - T)))
    mask3 = mask.reshape(B, 1, t_pad)
    m_spec = pl.BlockSpec((nb, 1, tt), lambda b, t: (b, 0, t))

    out = pl.pallas_call(
        _masked_max_kernel,
        out_shape=out_shape,
        grid_spec=pltpu.PrefetchScalarGridSpec(
            num_scalar_prefetch=0,
            grid=grid,
            in_specs=[x_spec, m_spec],
            out_specs=out_spec,
            scratch_shapes=scratch,
        ),
        compiler_params=cparams,
        cost_estimate=cost,
    )(hidden_state, mask3)
    return out.reshape(B, C)               # (N, C) == torch.max(masked, -1)[0]


def _ref(hidden_state, padding_mask=None):
    if padding_mask is None:
        return jnp.max(hidden_state, axis=-1, keepdims=True)
    m = padding_mask.astype(bool)[:, None, :]
    return jnp.max(
        jnp.where(m, hidden_state.astype(jnp.float32), -jnp.inf), axis=-1
    ).astype(hidden_state.dtype)


if __name__ == "__main__":
    key = jax.random.PRNGKey(0)
    k1, k2, k3 = jax.random.split(key, 3)

    # --- small NCT shape: N=2, C=4, T=16, with a padding mask (auto tiling) ---
    B, C, T = 2, 4, 16
    x = jax.random.normal(k1, (B, C, T), dtype=jnp.float32)
    lengths = jnp.array([12, 9], dtype=jnp.int32)
    mask = jnp.arange(T)[None, :] < lengths[:, None]          # (N, T) bool

    out = jax.block_until_ready(global_masked_max_pooling1d(x, mask))
    assert out.shape == (B, C)
    assert jnp.allclose(out, _ref(x, mask), atol=1e-6, rtol=1e-6), "masked mismatch"

    # --- padding_mask=None branch (== adaptive_max_pool1d(x, 1)) ---
    out_nm = jax.block_until_ready(global_masked_max_pooling1d(x, None))
    assert out_nm.shape == (B, C, 1)
    assert jnp.allclose(out_nm, _ref(x, None), atol=1e-6, rtol=1e-6), "no-mask mismatch"

    # --- larger T exercising the tiled reduction + ragged-tail masked path ---
    B2, C2, T2 = 2, 8, 640
    x2 = jax.random.normal(k2, (B2, C2, T2), dtype=jnp.float32)
    lengths2 = jnp.array([640, 301], dtype=jnp.int32)
    mask2 = jnp.arange(T2)[None, :] < lengths2[:, None]
    out2 = jax.block_until_ready(
        global_masked_max_pooling1d(x2, mask2, lane_tile=256, batch_block=1))
    assert out2.shape == (B2, C2)
    assert jnp.allclose(out2, _ref(x2, mask2), atol=1e-6, rtol=1e-6), "tiled mismatch"

    # --- no-mask path with a ragged tail (iota guard) + batch blocking, bf16 ---
    B3, C3, T3 = 2, 16, 300
    x3 = jax.random.normal(k3, (B3, C3, T3), dtype=jnp.float32).astype(jnp.bfloat16)
    out3 = jax.block_until_ready(
        global_masked_max_pooling1d(x3, None, lane_tile=128, batch_block=2))
    assert out3.shape == (B3, C3, 1)
    assert jnp.allclose(out3.astype(jnp.float32),
                        _ref(x3, None).astype(jnp.float32)), "bf16 tail mismatch"

    print("KERNEL_OK")
</pallas_src>

<mosaic_0001>
module attributes {stable_mosaic.version = 11 : i64} {
  func.func @_masked_max_kernel(%arg0: i32, %arg1: i32, %arg2: memref<2x4x16xf32, #tpu.memory_space<vmem>>, %arg3: memref<2x1x16xf32, #tpu.memory_space<vmem>>, %arg4: memref<2x4x1xf32, #tpu.memory_space<vmem>>, %arg5: memref<2x4x1xf32, #tpu.memory_space<vmem>>) attributes {dimension_semantics = [#tpu.dimension_semantics<parallel>, #tpu.dimension_semantics<arbitrary>], iteration_bounds = array<i64: 1, 1>, scalar_prefetch = 0 : i64, scratch_operands = 1 : i64, tpu.core_type = #tpu.core_type<tc>, window_params = [{transform_indices = @transform_0, window_bounds = array<i64: 2, 4, 16>}, {transform_indices = @transform_1, window_bounds = array<i64: 2, 1, 16>}, {transform_indices = @transform_2, window_bounds = array<i64: 2, 4, 1>}]} {
    %c0_i32 = arith.constant 0 : i32
    %0 = arith.cmpi eq, %arg1, %c0_i32 : i32
    %1 = arith.extui %0 : i1 to i32
    %c0_i32_0 = arith.constant 0 : i32
    %2 = arith.cmpi ne, %1, %c0_i32_0 : i32
    scf.if %2 {
      %cst_16 = arith.constant 0xFF800000 : f32
      %19 = vector.broadcast %cst_16 : f32 to vector<2x4x1xf32>
      %c0_17 = arith.constant 0 : index
      %c0_18 = arith.constant 0 : index
      %c0_19 = arith.constant 0 : index
      %20 = vector.load %arg5[%c0_17, %c0_18, %c0_19] : memref<2x4x1xf32, #tpu.memory_space<vmem>>, vector<2x4x1xf32>
      tpu.vector_store %arg5[%c0_17, %c0_18, %c0_19], %19 {strides = array<i32>} : memref<2x4x1xf32, #tpu.memory_space<vmem>>, vector<2x4x1xf32>,
    } else {
    }
    %c0 = arith.constant 0 : index
    %c0_1 = arith.constant 0 : index
    %c0_2 = arith.constant 0 : index
    %3 = vector.load %arg2[%c0, %c0_1, %c0_2] : memref<2x4x16xf32, #tpu.memory_space<vmem>>, vector<2x4x16xf32>
    %c0_3 = arith.constant 0 : index
    %c0_4 = arith.constant 0 : index
    %c0_5 = arith.constant 0 : index
    %4 = vector.load %arg3[%c0_3, %c0_4, %c0_5] : memref<2x1x16xf32, #tpu.memory_space<vmem>>, vector<2x1x16xf32>
    %cst = arith.constant 5.000000e-01 : f32
    %5 = vector.broadcast %cst : f32 to vector<2x1x16xf32>
    %6 = arith.cmpf ogt, %4, %5 : vector<2x1x16xf32>
    %cst_6 = arith.constant 0xFF800000 : f32
    %7 = vector.shape_cast %6 : vector<2x1x16xi1> to vector<2x1x16xi1>
    %8 = vector.broadcast %7 : vector<2x1x16xi1> to vector<2x4x16xi1>
    %9 = vector.broadcast %cst_6 : f32 to vector<2x4x16xf32>
    %10 = arith.select %8, %3, %9 : vector<2x4x16xi1>, vector<2x4x16xf32>
    %cst_7 = arith.constant dense<0xFF800000> : vector<2x4xf32>
    %11 = vector.multi_reduction <maximumf>, %10, %cst_7 [2] : vector<2x4x16xf32> to vector<2x4xf32>
    %12 = vector.shape_cast %11 : vector<2x4xf32> to vector<2x4x1xf32>
    %c0_8 = arith.constant 0 : index
    %c0_9 = arith.constant 0 : index
    %c0_10 = arith.constant 0 : index
    %13 = vector.load %arg5[%c0_8, %c0_9, %c0_10] : memref<2x4x1xf32, #tpu.memory_space<vmem>>, vector<2x4x1xf32>
    %14 = arith.maximumf %13, %12 : vector<2x4x1xf32>
    %c0_11 = arith.constant 0 : index
    %c0_12 = arith.constant 0 : index
    %c0_13 = arith.constant 0 : index
    %15 = vector.load %arg5[%c0_11, %c0_12, %c0_13] : memref<2x4x1xf32, #tpu.memory_space<vmem>>, vector<2x4x1xf32>
    tpu.vector_store %arg5[%c0_11, %c0_12, %c0_13], %14 {strides = array<i32>} : memref<2x4x1xf32, #tpu.memory_space<vmem>>, vector<2x4x1xf32>,
    %c0_i32_14 = arith.constant 0 : i32
    %16 = arith.cmpi eq, %arg1, %c0_i32_14 : i32
    %17 = arith.extui %16 : i1 to i32
    %c0_i32_15 = arith.constant 0 : i32
    %18 = arith.cmpi ne, %17, %c0_i32_15 : i32
    scf.if %18 {
      %c0_16 = arith.constant 0 : index
      %c0_17 = arith.constant 0 : index
      %c0_18 = arith.constant 0 : index
      %19 = vector.load %arg5[%c0_16, %c0_17, %c0_18] : memref<2x4x1xf32, #tpu.memory_space<vmem>>, vector<2x4x1xf32>
      %c0_19 = arith.constant 0 : index
      %c0_20 = arith.constant 0 : index
      %c0_21 = arith.constant 0 : index
      %20 = vector.load %arg4[%c0_19, %c0_20, %c0_21] : memref<2x4x1xf32, #tpu.memory_space<vmem>>, vector<2x4x1xf32>
      tpu.vector_store %arg4[%c0_19, %c0_20, %c0_21], %19 {strides = array<i32>} : memref<2x4x1xf32, #tpu.memory_space<vmem>>, vector<2x4x1xf32>,
    } else {
    }
    return
  }
  func.func @transform_0(%arg0: i32, %arg1: i32) -> (i32, i32, i32) {
    %c0_i32 = arith.constant 0 : i32
    %c0_i32_0 = arith.constant 0 : i32
    return %arg0, %c0_i32, %arg1 : i32, i32, i32
  }
  func.func @transform_1(%arg0: i32, %arg1: i32) -> (i32, i32, i32) {
    %c0_i32 = arith.constant 0 : i32
    %c0_i32_0 = arith.constant 0 : i32
    return %arg0, %c0_i32, %arg1 : i32, i32, i32
  }
  func.func @transform_2(%arg0: i32, %arg1: i32) -> (i32, i32, i32) {
    %c0_i32 = arith.constant 0 : i32
    %c0_i32_0 = arith.constant 0 : i32
    %c0_i32_1 = arith.constant 0 : i32
    return %arg0, %c0_i32, %c0_i32_0 : i32, i32, i32
  }
}

</mosaic_0001>

<llo_original>
// kernel: tpu_custom_call.1
$region0: #{tpu_custom_call.1}
  #allocation0 [shape = 'u32[]', space=smem, size = 0x4, offset = 0x4, fixed_abs, tag = 'smem constant byte address 0x4 - core index']
  #allocation1 [shape = 'u32[144,128]{1,0:T(1,128)}', space=vmem, size = 0x12000, scoped, tag = 'internal scratch']
  #allocation2 [shape = 'f32[2,4,1]{2,1,0:T(4,128)}', space=vmem, size = 0x1000, scoped, tag = 'scratch operand']
  %s0 = inlined_call_operand.hbm [shape: f32[2,4,16], index: 0, kind: input, shape index: {}]
  %s1 = inlined_call_operand.vmem [shape: f32[2,1,16], index: 1, kind: input, shape index: {}]
  %s2 = inlined_call_operand.vmem [shape: f32[2,4,1], index: 2, kind: output, shape index: {}]
  %s3 = sld [smem:[#allocation0]]
  $region30: #{tpu_custom_call.1} parent=0
    _
  %s5 = ssub.s32 1, %s3
  %s6 = scalar_select 0, %s5, %s3
  $region1: #{tpu_custom_call.1} parent=0
    #allocation3 [shape = 'u8[4096]{0}', space=vmem, size = 0x1000, scoped, tag = 'input window, operand 0, single buffered']
    #allocation4 [shape = 's32[1]{0}', space=sflag, size = 0x4, scoped, tag = 'scoped memory for tpu_custom_call.1']
    %7 = vsyncpa [#allocation4], 0
    // Predicated region
    $region2: #{tpu_custom_call.1} parent=1 // pred_check
      _
    $region3: #{tpu_custom_call.1} parent=1 // pred_check_branch
      %9 = sbr.rel (0) target = $region5
    $region4: #{tpu_custom_call.1} parent=1 // pred_region
      %s11 = ssub.s32 128, 128
      %12 = vsyncadd [#allocation4], %s11
      %s13 = sshll.u32 [#allocation3], 4
      %s14 = int_to_ptr.vmem [resolvable:$true] %s13
      %19 = dma.hbm_to_vmem [thread:$0]  %s0, 128, %s14, [#allocation4], 64, 64, 4
    $region5: #{tpu_custom_call.1} parent=1 // pred_fallthru
      _
    // Predicated region
    $region6: #{tpu_custom_call.1} parent=1 // pred_check
      _
    $region7: #{tpu_custom_call.1} parent=1 // pred_check_branch
      %21 = sbr.rel (0) target = $region9
    $region8: #{tpu_custom_call.1} parent=1 // pred_region
      _
    $region9: #{tpu_custom_call.1} parent=1 // pred_fallthru
      _
    // Predicated region
    $region10: #{tpu_custom_call.1} parent=1 // pred_check
      _
    $region11: #{tpu_custom_call.1} parent=1 // pred_check_branch
      %23 = sbr.rel (0) target = $region13
    $region12: #{tpu_custom_call.1} parent=1 // pred_region
      %24 = dma.done [#allocation4], 128
    $region13: #{tpu_custom_call.1} parent=1 // pred_fallthru
      _
    %p25 = scmp.eq.s32.totalorder 0, 0
    // Predicated region
    $region14: #{tpu_custom_call.1} parent=1 // pred_check
      %p26 = pneg %p25
    $region15: #{tpu_custom_call.1} parent=1 // pred_check_branch
      %28 = sbr.rel (%p26) target = $region17
    $region16: #{tpu_custom_call.1} parent=1 // pred_region
      %vm29 = vcmask 3072
      %30 = vst.msk [vmem:[#allocation2] sm:$0xf] %vm29, -inf
      %31 = vst.msk [vmem:[#allocation2 + $0x4] sm:$0xf] %vm29, -inf
    $region17: #{tpu_custom_call.1} parent=1 // pred_fallthru
      _
    %v32 = vld [vmem:[#allocation3] sm:$0xf]
    %v33 = vld [vmem:[#allocation3 + $0x4] sm:$0xf]
    %v34 = vld [vmem:[%s1] sm:$0x1]
    %v35 = vld [vmem:[%s1 + $0x1] sm:$0x1]
    %vm36 = vcmp.gt.f32.partialorder %v34, 0.5
    %vm37 = vcmp.gt.f32.partialorder %v35, 0.5
    %v38 = vsel %vm36, 1, 0
    %v39 = vsel %vm37, 1, 0
    %v40 = vlaneseq
    %v41 = vshrl.u32 %v40, 7
    %v42 = vsub.s32 0, %v41
    %v43 = vrot.slane %v38, %v42
    %v44 = vlaneseq
    %v45 = vshrl.u32 %v44, 7
    %v46 = vsub.s32 0, %v45
    %v47 = vrot.slane %v39, %v46
    %vm48 = vcmp.eq.s32.totalorder %v43, 1
    %vm49 = vcmp.eq.s32.totalorder %v47, 1
    %v50 = vsel %vm48, %v32, -inf
    %v51 = vsel %vm49, %v33, -inf
    %vm52 = vcmask 125952
    %v53 = vsel %vm52, %v50, -inf
    %54 = vmax.xlane.f32.xlu0 %v53
    %v55 = vpop.xlane.xlu0 %54
    %v56 = vsel %vm52, %v51, -inf
    %57 = vmax.xlane.f32.xlu0 %v56
    %v58 = vpop.xlane.xlu0 %57
    %v59 = vld [vmem:[#allocation2] sm:$0xf]
    %v60 = vld [vmem:[#allocation2 + $0x4] sm:$0xf]
    %v61 = vmax.f32 %v59, %v55
    %v62 = vmax.f32 %v60, %v58
    %vm63 = vcmask 3072
    %64 = vst.msk [vmem:[#allocation2] sm:$0xf] %vm63, %v61
    %65 = vst.msk [vmem:[#allocation2 + $0x4] sm:$0xf] %vm63, %v62
    // Predicated region
    $region18: #{tpu_custom_call.1} parent=1 // pred_check
      %p66 = pneg %p25
    $region19: #{tpu_custom_call.1} parent=1 // pred_check_branch
      %68 = sbr.rel (%p66) target = $region21
    $region20: #{tpu_custom_call.1} parent=1 // pred_region
      %v69 = vld [vmem:[#allocation2] sm:$0xf]
      %v70 = vld [vmem:[#allocation2 + $0x4] sm:$0xf]
      %71 = vst.msk [vmem:[%s2] sm:$0xf] %vm63, %v69
      %72 = vst.msk [vmem:[%s2 + $0x4] sm:$0xf] %vm63, %v70
    $region21: #{tpu_custom_call.1} parent=1 // pred_fallthru
      _
    // Predicated region
    $region22: #{tpu_custom_call.1} parent=1 // pred_check
      _
    $region23: #{tpu_custom_call.1} parent=1 // pred_check_branch
      %74 = sbr.rel (0) target = $region25
    $region24: #{tpu_custom_call.1} parent=1 // pred_region
      _
    $region25: #{tpu_custom_call.1} parent=1 // pred_fallthru
      _
    // Predicated region
    $region26: #{tpu_custom_call.1} parent=1 // pred_check
      _
    $region27: #{tpu_custom_call.1} parent=1 // pred_check_branch
      %76 = sbr.rel (0) target = $region29
    $region28: #{tpu_custom_call.1} parent=1 // pred_region
      _
    $region29: #{tpu_custom_call.1} parent=1 // pred_fallthru
      _
    %77 = vsyncpa [#allocation4], 1

</llo_original>
